<compile_context>
chip_gen: v7x
topology: tpu7x:2x2x1
jax: 0.10.0
libtpu: 0.0.40
codegen_flags: <defaults>
</compile_context>

<pallas_src>
import math
import numpy as np
import jax
import jax.numpy as jnp
from jax.experimental import pallas as pl
from jax.experimental.pallas import tpu as pltpu


# ------------------------------ Pallas kernel -------------------------------

def _make_root_kernel(n_children: int, residual: bool):
    """Fused kernel: sum_i x_i @ W_i -> + bias -> (+x_0) -> ReLU -> bf16."""
    def kernel(*refs):
        x_refs = refs[:n_children]
        w_refs = refs[n_children:2 * n_children]
        b_ref = refs[2 * n_children]
        o_ref = refs[-1]

        # concat(x_i) @ W  ==  sum_i x_i @ W_i  (weight split along rows)
        acc = jnp.dot(x_refs[0][...], w_refs[0][...],
                      preferred_element_type=jnp.float32)
        for xr, wr in zip(x_refs[1:], w_refs[1:]):
            acc = acc + jnp.dot(xr[...], wr[...],
                                preferred_element_type=jnp.float32)
        y = acc + b_ref[...]                       # BN scale folded into W
        if residual:
            # children[0] is already resident in VMEM as the first matmul
            # operand; reuse it for the residual add.
            y = y + x_refs[0][...].astype(jnp.float32)
        o_ref[...] = jnp.maximum(y, 0.0).astype(o_ref.dtype)
    return kernel


# ------------------------------ helpers --------------------------------------

def fold_bn(gamma, beta, mean, var, eps=1e-5):
    s = gamma / jnp.sqrt(var + eps)
    b = beta - mean * s
    return s, b


def _pick_tile_rows(M, tile_rows, min_steps=2):
    """Multiple-of-8 row tile; shrink so the parallel grid axis has >= min_steps
    steps (keeps v7x's second TensorCore busy, enables pipelining)."""
    tm = min(tile_rows, max(8, M))
    tm = max(8, (tm // 8) * 8)
    while pl.cdiv(M, tm) < min_steps and tm > 8:
        tm = max(8, ((tm // 2) // 8) * 8)
    return tm


# ------------------------------ wrapper / call -------------------------------

def dla_root_forward_nhwc(children_nhwc, weight, bn_scale, bn_bias, *, residual,
                          tile_rows=1024, out_dtype=jnp.bfloat16):
    """DlaRoot forward, NHWC-native (preferred; no layout plumbing).

    children_nhwc : list of (N, H, W, Ci) arrays (ideally already bf16).
    weight        : (sum_i Ci, Cout) matrix = 1x1 conv weight, i.e.
                    torch_weight[:, :, 0, 0].T.
    bn_scale/bias : folded BatchNorm scale / bias, shape (Cout,).
    Returns (N, H, W, Cout) in `out_dtype` (bf16 by default).
    """
    n_children = len(children_nhwc)
    N, H, W, _ = children_nhwc[0].shape
    M = N * H * W
    Cout = weight.shape[1]

    cins, x2ds = [], []
    for c in children_nhwc:
        assert c.shape[:3] == (N, H, W)
        ci = c.shape[-1]
        cins.append(ci)
        # NHWC -> (M, Ci) is a free view (row-major contiguous).  astype is a
        # no-op when the caller already hands bf16 activations.
        x2ds.append(c.reshape(M, ci).astype(jnp.bfloat16))
    if residual:
        assert cins[0] == Cout, \
            "residual add requires children[0] channels == out_channels"

    # Fold BN scale into weight columns (f32), split rows per child, cast bf16.
    w_folded = weight.astype(jnp.float32) * bn_scale.astype(jnp.float32)[None, :]
    w_splits, off = [], 0
    for ci in cins:
        w_splits.append(w_folded[off:off + ci].astype(jnp.bfloat16))
        off += ci
    assert off == weight.shape[0]

    tm = _pick_tile_rows(M, tile_rows)
    grid = (pl.cdiv(M, tm),)

    in_specs = (
        [pl.BlockSpec((tm, ci), lambda m: (m, 0)) for ci in cins] +
        [pl.BlockSpec((ci, Cout), lambda m: (0, 0)) for ci in cins] +
        [pl.BlockSpec((1, Cout), lambda m: (0, 0))]
    )

    y2d = pl.pallas_call(
        _make_root_kernel(n_children, residual),
        out_shape=jax.ShapeDtypeStruct((M, Cout), out_dtype),
        grid=grid,
        in_specs=in_specs,
        out_specs=pl.BlockSpec((tm, Cout), lambda m: (m, 0)),
        compiler_params=pltpu.CompilerParams(
            dimension_semantics=("parallel",)),
    )(*x2ds, *w_splits,
      bn_bias.reshape(1, -1).astype(jnp.float32))

    return y2d.reshape(N, H, W, Cout)


def dla_root_forward(children_nchw, weight, bn_scale, bn_bias, *, residual,
                     **kwargs):
    """NCHW compatibility wrapper (matches the PyTorch module's layout).
    Note: the NCHW<->NHWC transposes here are extra XLA HBM passes; prefer the
    NHWC-native entry point when the surrounding model is NHWC."""
    nhwc = [jnp.transpose(c, (0, 2, 3, 1)) for c in children_nchw]
    y = dla_root_forward_nhwc(nhwc, weight, bn_scale, bn_bias,
                              residual=residual, **kwargs)
    return jnp.transpose(y, (0, 3, 1, 2))


# ------------------------------ pure-JAX reference ---------------------------

def reference_forward_nhwc(children_nhwc, weight, bn_scale, bn_bias, *, residual):
    # Reproduces the PyTorch forward (inference-mode BN), mirroring the
    # kernel's boundary casts (bf16 operands / weights, f32 accumulate,
    # bf16 output).
    xs = [c.astype(jnp.bfloat16).astype(jnp.float32) for c in children_nhwc]
    x = jnp.concatenate(xs, axis=-1)
    w_folded = (weight.astype(jnp.float32)
                * bn_scale.astype(jnp.float32)[None, :]).astype(jnp.bfloat16)
    y = jax.lax.conv_general_dilated(
        x, w_folded.astype(jnp.float32)[None, None], (1, 1), 'VALID',
        dimension_numbers=('NHWC', 'HWIO', 'NHWC'),
        precision=jax.lax.Precision.HIGHEST)
    y = y + bn_bias.astype(jnp.float32)
    if residual:
        y = y + xs[0]
    return jnp.maximum(y, 0.0).astype(jnp.bfloat16)


# ----------------------------------- main ------------------------------------

if __name__ == "__main__":
    # DlaRoot(in_channels=128+64, out_channels=128, kernel_size=1, residual=True)
    #   children[0]: (2, 128, 16, 16)  (channels == out_channels, so the
    #                                   residual add is well-formed, as in DLA)
    #   children[1]: (2,  64, 16, 16)
    key = jax.random.PRNGKey(0)
    k0, k1, kw, kg, kb, km, kv = jax.random.split(key, 7)

    N, H, W = 2, 16, 16
    c0, c1, cout = 128, 64, 128

    x0_nchw = jax.random.normal(k0, (N, c0, H, W), jnp.float32)
    x1_nchw = jax.random.normal(k1, (N, c1, H, W), jnp.float32)
    x0_nhwc = jnp.transpose(x0_nchw, (0, 2, 3, 1))
    x1_nhwc = jnp.transpose(x1_nchw, (0, 2, 3, 1))

    cin = c0 + c1
    weight = jax.random.normal(kw, (cin, cout), jnp.float32) / math.sqrt(cin)
    gamma = jax.random.uniform(kg, (cout,), minval=0.5, maxval=1.5)
    beta = jax.random.normal(kb, (cout,)) * 0.1
    mean = jax.random.normal(km, (cout,)) * 0.1
    var = jax.random.uniform(kv, (cout,), minval=0.5, maxval=1.5)
    s, b = fold_bn(gamma, beta, mean, var)

    for residual in (True, False):
        # NHWC-native path (primary).
        y = jax.block_until_ready(
            dla_root_forward_nhwc([x0_nhwc, x1_nhwc], weight, s, b,
                                  residual=residual))
        y_ref = jax.block_until_ready(
            reference_forward_nhwc([x0_nhwc, x1_nhwc], weight, s, b,
                                   residual=residual))
        np.testing.assert_allclose(np.asarray(y, dtype=np.float32),
                                   np.asarray(y_ref, dtype=np.float32),
                                   rtol=2e-2, atol=2e-2)

        # NCHW compatibility wrapper (drop-in for the PyTorch module layout).
        y_nchw = jax.block_until_ready(
            dla_root_forward([x0_nchw, x1_nchw], weight, s, b,
                             residual=residual))
        y_ref_nchw = jnp.transpose(y_ref, (0, 3, 1, 2))
        np.testing.assert_allclose(np.asarray(y_nchw, dtype=np.float32),
                                   np.asarray(y_ref_nchw, dtype=np.float32),
                                   rtol=2e-2, atol=2e-2)

    print("KERNEL_OK")
</pallas_src>

<mosaic_0001>
module attributes {stable_mosaic.version = 11 : i64} {
  func.func @kernel(%arg0: i32, %arg1: memref<256x128xbf16, #tpu.memory_space<vmem>>, %arg2: memref<256x64xbf16, #tpu.memory_space<vmem>>, %arg3: memref<128x128xbf16, #tpu.memory_space<vmem>>, %arg4: memref<64x128xbf16, #tpu.memory_space<vmem>>, %arg5: memref<1x128xf32, #tpu.memory_space<vmem>>, %arg6: memref<256x128xbf16, #tpu.memory_space<vmem>>) attributes {dimension_semantics = [#tpu.dimension_semantics<parallel>], iteration_bounds = array<i64: 2>, scalar_prefetch = 0 : i64, scratch_operands = 0 : i64, tpu.core_type = #tpu.core_type<tc>, window_params = [{transform_indices = @transform_0, window_bounds = array<i64: 256, 128>}, {transform_indices = @transform_1, window_bounds = array<i64: 256, 64>}, {pipeline_mode = #tpu.pipeline_mode<synchronous>, transform_indices = @transform_2, window_bounds = array<i64: 128, 128>}, {pipeline_mode = #tpu.pipeline_mode<synchronous>, transform_indices = @transform_3, window_bounds = array<i64: 64, 128>}, {pipeline_mode = #tpu.pipeline_mode<synchronous>, transform_indices = @transform_4, window_bounds = array<i64: 1, 128>}, {transform_indices = @transform_5, window_bounds = array<i64: 256, 128>}]} {
    %c0 = arith.constant 0 : index
    %c0_0 = arith.constant 0 : index
    %0 = vector.load %arg1[%c0, %c0_0] : memref<256x128xbf16, #tpu.memory_space<vmem>>, vector<256x128xbf16>
    %c0_1 = arith.constant 0 : index
    %c0_2 = arith.constant 0 : index
    %1 = vector.load %arg3[%c0_1, %c0_2] : memref<128x128xbf16, #tpu.memory_space<vmem>>, vector<128x128xbf16>
    %cst = arith.constant dense<0.000000e+00> : vector<256x128xf32>
    %2 = tpu.matmul %0, %1, %cst {dimension_numbers = #tpu.dot_dimension_numbers<[1], [0], [0], [1], [0, 0, 1, 1], [], []>} : vector<256x128xbf16>, vector<128x128xbf16>, vector<256x128xf32> -> vector<256x128xf32>
    %c0_3 = arith.constant 0 : index
    %c0_4 = arith.constant 0 : index
    %3 = vector.load %arg2[%c0_3, %c0_4] : memref<256x64xbf16, #tpu.memory_space<vmem>>, vector<256x64xbf16>
    %c0_5 = arith.constant 0 : index
    %c0_6 = arith.constant 0 : index
    %4 = vector.load %arg4[%c0_5, %c0_6] : memref<64x128xbf16, #tpu.memory_space<vmem>>, vector<64x128xbf16>
    %cst_7 = arith.constant dense<0.000000e+00> : vector<256x128xf32>
    %5 = tpu.matmul %3, %4, %cst_7 {dimension_numbers = #tpu.dot_dimension_numbers<[1], [0], [0], [1], [0, 0, 1, 1], [], []>} : vector<256x64xbf16>, vector<64x128xbf16>, vector<256x128xf32> -> vector<256x128xf32>
    %6 = arith.addf %2, %5 : vector<256x128xf32>
    %c0_8 = arith.constant 0 : index
    %c0_9 = arith.constant 0 : index
    %7 = vector.load %arg5[%c0_8, %c0_9] : memref<1x128xf32, #tpu.memory_space<vmem>>, vector<1x128xf32>
    %8 = vector.broadcast %7 : vector<1x128xf32> to vector<256x128xf32>
    %9 = arith.addf %6, %8 : vector<256x128xf32>
    %c0_10 = arith.constant 0 : index
    %c0_11 = arith.constant 0 : index
    %10 = vector.load %arg1[%c0_10, %c0_11] : memref<256x128xbf16, #tpu.memory_space<vmem>>, vector<256x128xbf16>
    %11 = arith.extf %10 : vector<256x128xbf16> to vector<256x128xf32>
    %12 = arith.addf %9, %11 : vector<256x128xf32>
    %cst_12 = arith.constant 0.000000e+00 : f32
    %13 = vector.broadcast %cst_12 : f32 to vector<256x128xf32>
    %14 = arith.maximumf %12, %13 : vector<256x128xf32>
    %15 = arith.truncf %14 : vector<256x128xf32> to vector<256x128xbf16>
    %c0_13 = arith.constant 0 : index
    %c0_14 = arith.constant 0 : index
    %16 = vector.load %arg6[%c0_13, %c0_14] : memref<256x128xbf16, #tpu.memory_space<vmem>>, vector<256x128xbf16>
    tpu.vector_store %arg6[%c0_13, %c0_14], %15 {strides = array<i32>} : memref<256x128xbf16, #tpu.memory_space<vmem>>, vector<256x128xbf16>,
    return
  }
  func.func @transform_0(%arg0: i32) -> (i32, i32) {
    %c0_i32 = arith.constant 0 : i32
    %c0_i32_0 = arith.constant 0 : i32
    return %arg0, %c0_i32 : i32, i32
  }
  func.func @transform_1(%arg0: i32) -> (i32, i32) {
    %c0_i32 = arith.constant 0 : i32
    %c0_i32_0 = arith.constant 0 : i32
    return %arg0, %c0_i32 : i32, i32
  }
  func.func @transform_2(%arg0: i32) -> (i32, i32) {
    %c0_i32 = arith.constant 0 : i32
    %c0_i32_0 = arith.constant 0 : i32
    %c0_i32_1 = arith.constant 0 : i32
    return %c0_i32, %c0_i32_0 : i32, i32
  }
  func.func @transform_3(%arg0: i32) -> (i32, i32) {
    %c0_i32 = arith.constant 0 : i32
    %c0_i32_0 = arith.constant 0 : i32
    %c0_i32_1 = arith.constant 0 : i32
    return %c0_i32, %c0_i32_0 : i32, i32
  }
  func.func @transform_4(%arg0: i32) -> (i32, i32) {
    %c0_i32 = arith.constant 0 : i32
    %c0_i32_0 = arith.constant 0 : i32
    %c0_i32_1 = arith.constant 0 : i32
    return %c0_i32, %c0_i32_0 : i32, i32
  }
  func.func @transform_5(%arg0: i32) -> (i32, i32) {
    %c0_i32 = arith.constant 0 : i32
    %c0_i32_0 = arith.constant 0 : i32
    return %arg0, %c0_i32 : i32, i32
  }
}

</mosaic_0001>

<llo_original>
// kernel: tpu_custom_call.1
$region0: #{tpu_custom_call.1}
  #allocation0 [shape = 'u32[]', space=smem, size = 0x4, offset = 0x4, fixed_abs, tag = 'smem constant byte address 0x4 - core index']
  #allocation1 [shape = 'u32[144,128]{1,0:T(1,128)}', space=vmem, size = 0x12000, scoped, tag = 'internal scratch']
  %s0 = inlined_call_operand.vmem [shape: bf16[512,128], index: 0, kind: input, shape index: {}]
  %s1 = inlined_call_operand.vmem [shape: bf16[512,64], index: 1, kind: input, shape index: {}]
  %s2 = inlined_call_operand.vmem [shape: bf16[128,128], index: 2, kind: input, shape index: {}]
  %s3 = inlined_call_operand.vmem [shape: bf16[64,128], index: 3, kind: input, shape index: {}]
  %s4 = inlined_call_operand.vmem [shape: f32[1,128], index: 4, kind: input, shape index: {}]
  %s5 = inlined_call_operand.hbm [shape: bf16[512,128], index: 5, kind: output, shape index: {}]
  %s6 = sld [smem:[#allocation0]]
  $region53: #{tpu_custom_call.1} parent=0
    _
  %s8 = ssub.s32 1, %s6
  %s9 = scalar_select 0, %s8, %s6
  $region1: #{tpu_custom_call.1} parent=0
    #allocation2 [shape = 'u8[131072]{0}', space=vmem, size = 0x20000, scoped, tag = 'output window, operand 0']
    #allocation3 [shape = 's32[2]{0}', space=sflag, size = 0x8, scoped, tag = 'scoped memory for tpu_custom_call.1']
    %10 = vsyncpa [#allocation3], 0
    %s11 = scalar_lea.sflag [#allocation3], 1
    %12 = vsyncpa %s11, 0
    loop: start=0, step=1, limit=4
    $region2: #{tpu_custom_call.1} parent=1 // loop_pre_header
      _
    $region3: #{tpu_custom_call.1} parent=1 // loop_header
      %s14 = sphi 0, %s18
      %p15 = scmp.ge.s32.totalorder %s14, 4
      %s24 = sphi 0, %s26
      %s27 = sphi 0, %s24
      %s28 = sphi 0, %s27
      %s44 = sphi 0, %s28
      %s50 = sphi 0, %s52
      %s53 = sphi 0, %s50
      %s54 = sphi 0, %s53
      %s70 = sphi 0, %s54
      %s74 = sphi 0, %s74
      %s76 = sphi 0, %s74
      %s77 = sphi 0, %s76
      %s91 = sphi 0, %s77
      %s95 = sphi 0, %s95
      %s97 = sphi 0, %s95
      %s98 = sphi 0, %s97
      %s112 = sphi 0, %s98
      %s116 = sphi 0, %s116
      %s118 = sphi 0, %s116
      %s119 = sphi 0, %s118
      %s133 = sphi 0, %s119
      %s139 = sphi 0, %s141
      %s142 = sphi 0, %s139
      %s143 = sphi 0, %s142
      %s159 = sphi 0, %s143
    $region4: #{tpu_custom_call.1} parent=1 // loop_header_branch
      %17 = sbr.rel (%p15) target = $region8
    $region5: #{tpu_custom_call.1} parent=1 // loop_body
      %s19 = ssub.s32 %s14, 1
      %s20 = ssub.s32 %s14, 2
      %s21 = sadd.s32 %s14, 1
      %s22 = ssub.s32 %s14, %s21
      %p23 = scmp.eq.s32.totalorder %s22, 0
      %s25 = sadd.s32 %s24, 1
      %s26 = scalar_select %p23, %s24, %s25
      %p29 = pneg %p23
      %p30 = scmp.eq.s32.totalorder %s14, 1
      %p31 = por %p29, %p30
      %p32 = scmp.ne.s32.totalorder %s24, %s27
      %p33 = scmp.eq.s32.totalorder %s14, 0
      %p34 = por %p32, %p33
      %p35 = scmp.ne.s32.totalorder %s24, %s27
      %p36 = scmp.eq.s32.totalorder %s19, 1
      %p37 = por %p35, %p36
      %p38 = scmp.ne.s32.totalorder %s27, %s28
      %p39 = scmp.eq.s32.totalorder %s19, 0
      %p40 = por %p38, %p39
      %p41 = scmp.ne.s32.totalorder %s27, %s28
      %p42 = scmp.eq.s32.totalorder %s20, 1
      %p43 = por %p41, %p42
      %p45 = scmp.ne.s32.totalorder %s28, %s44
      %p46 = scmp.eq.s32.totalorder %s20, 0
      %p47 = por %p45, %p46
      %s48 = ssub.s32 %s14, %s21
      %p49 = scmp.eq.s32.totalorder %s48, 0
      %s51 = sadd.s32 %s50, 1
      %s52 = scalar_select %p49, %s50, %s51
      %p55 = pneg %p49
      %p56 = scmp.eq.s32.totalorder %s14, 1
      %p57 = por %p55, %p56
      %p58 = scmp.ne.s32.totalorder %s50, %s53
      %p59 = scmp.eq.s32.totalorder %s14, 0
      %p60 = por %p58, %p59
      %p61 = scmp.ne.s32.totalorder %s50, %s53
      %p62 = scmp.eq.s32.totalorder %s19, 1
      %p63 = por %p61, %p62
      %p64 = scmp.ne.s32.totalorder %s53, %s54
      %p65 = scmp.eq.s32.totalorder %s19, 0
      %p66 = por %p64, %p65
      %p67 = scmp.ne.s32.totalorder %s53, %s54
      %p68 = scmp.eq.s32.totalorder %s20, 1
      %p69 = por %p67, %p68
      %p71 = scmp.ne.s32.totalorder %s54, %s70
      %p72 = scmp.eq.s32.totalorder %s20, 0
      %p73 = por %p71, %p72
      %s75 = sadd.s32 %s74, 1
      %p78 = scmp.eq.s32.totalorder %s14, 1
      %p79 = scmp.ne.s32.totalorder %s74, %s76
      %p80 = scmp.eq.s32.totalorder %s14, 0
      %p81 = por %p79, %p80
      %p82 = scmp.ne.s32.totalorder %s74, %s76
      %p83 = scmp.eq.s32.totalorder %s19, 1
      %p84 = por %p82, %p83
      %p85 = scmp.ne.s32.totalorder %s76, %s77
      %p86 = scmp.eq.s32.totalorder %s19, 0
      %p87 = por %p85, %p86
      %p88 = scmp.ne.s32.totalorder %s76, %s77
      %p89 = scmp.eq.s32.totalorder %s20, 1
      %p90 = por %p88, %p89
      %p92 = scmp.ne.s32.totalorder %s77, %s91
      %p93 = scmp.eq.s32.totalorder %s20, 0
      %p94 = por %p92, %p93
      %s96 = sadd.s32 %s95, 1
      %p99 = scmp.eq.s32.totalorder %s14, 1
      %p100 = scmp.ne.s32.totalorder %s95, %s97
      %p101 = scmp.eq.s32.totalorder %s14, 0
      %p102 = por %p100, %p101
      %p103 = scmp.ne.s32.totalorder %s95, %s97
      %p104 = scmp.eq.s32.totalorder %s19, 1
      %p105 = por %p103, %p104
      %p106 = scmp.ne.s32.totalorder %s97, %s98
      %p107 = scmp.eq.s32.totalorder %s19, 0
      %p108 = por %p106, %p107
      %p109 = scmp.ne.s32.totalorder %s97, %s98
      %p110 = scmp.eq.s32.totalorder %s20, 1
      %p111 = por %p109, %p110
      %p113 = scmp.ne.s32.totalorder %s98, %s112
      %p114 = scmp.eq.s32.totalorder %s20, 0
      %p115 = por %p113, %p114
      %s117 = sadd.s32 %s116, 1
      %p120 = scmp.eq.s32.totalorder %s14, 1
      %p121 = scmp.ne.s32.totalorder %s116, %s118
      %p122 = scmp.eq.s32.totalorder %s14, 0
      %p123 = por %p121, %p122
      %p124 = scmp.ne.s32.totalorder %s116, %s118
      %p125 = scmp.eq.s32.totalorder %s19, 1
      %p126 = por %p124, %p125
      %p127 = scmp.ne.s32.totalorder %s118, %s119
      %p128 = scmp.eq.s32.totalorder %s19, 0
      %p129 = por %p127, %p128
      %p130 = scmp.ne.s32.totalorder %s118, %s119
      %p131 = scmp.eq.s32.totalorder %s20, 1
      %p132 = por %p130, %p131
      %p134 = scmp.ne.s32.totalorder %s119, %s133
      %p135 = scmp.eq.s32.totalorder %s20, 0
      %p136 = por %p134, %p135
      %s137 = ssub.s32 %s14, %s21
      %p138 = scmp.eq.s32.totalorder %s137, 0
      %s140 = sadd.s32 %s139, 1
      %s141 = scalar_select %p138, %s139, %s140
      %p144 = pneg %p138
      %p145 = scmp.eq.s32.totalorder %s14, 1
      %p146 = por %p144, %p145
      %p147 = scmp.ne.s32.totalorder %s139, %s142
      %p148 = scmp.eq.s32.totalorder %s14, 0
      %p149 = por %p147, %p148
      %p150 = scmp.ne.s32.totalorder %s139, %s142
      %p151 = scmp.eq.s32.totalorder %s19, 1
      %p152 = por %p150, %p151
      %p153 = scmp.ne.s32.totalorder %s142, %s143
      %p154 = scmp.eq.s32.totalorder %s19, 0
      %p155 = por %p153, %p154
      %p156 = scmp.ne.s32.totalorder %s142, %s143
      %p157 = scmp.eq.s32.totalorder %s20, 1
      %p158 = por %p156, %p157
      %p160 = scmp.ne.s32.totalorder %s143, %s159
      %p161 = scmp.eq.s32.totalorder %s20, 0
      %p162 = por %p160, %p161
      %p163 = scmp.le.s32.totalorder 1, %s14
      %p164 = scmp.lt.s32.totalorder %s14, 3
      %p165 = pnand %p163, %p164
      %p166 = pneg %p165
      // Predicated region
      $region9: #{tpu_custom_call.1} parent=5 // pred_check
        _
      $region10: #{tpu_custom_call.1} parent=5 // pred_check_branch
        %168 = sbr.rel (%p165) target = $region12
      $region11: #{tpu_custom_call.1} parent=5 // pred_region
        %s169 = ssub.s32 %s14, 1
        // Predicated region
        $region13: #{tpu_custom_call.1} parent=11 // pred_check
          %p170 = pneg %p87
        $region14: #{tpu_custom_call.1} parent=11 // pred_check_branch
          %172 = sbr.rel (%p170) target = $region16
        $region15: #{tpu_custom_call.1} parent=11 // pred_region
          _
        $region16: #{tpu_custom_call.1} parent=11 // pred_fallthru
          _
        // Predicated region
        $region17: #{tpu_custom_call.1} parent=11 // pred_check
          %p173 = pneg %p108
        $region18: #{tpu_custom_call.1} parent=11 // pred_check_branch
          %175 = sbr.rel (%p173) target = $region20
        $region19: #{tpu_custom_call.1} parent=11 // pred_region
          _
        $region20: #{tpu_custom_call.1} parent=11 // pred_fallthru
          _
        // Predicated region
        $region21: #{tpu_custom_call.1} parent=11 // pred_check
          %p176 = pneg %p129
        $region22: #{tpu_custom_call.1} parent=11 // pred_check_branch
          %178 = sbr.rel (%p176) target = $region24
        $region23: #{tpu_custom_call.1} parent=11 // pred_region
          _
        $region24: #{tpu_custom_call.1} parent=11 // pred_fallthru
          _
      $region12: #{tpu_custom_call.1} parent=5 // pred_fallthru
        _
      %p179 = scmp.lt.s32.totalorder %s14, 2
      // Predicated region
      $region25: #{tpu_custom_call.1} parent=5 // pred_check
        %p180 = pneg %p179
      $region26: #{tpu_custom_call.1} parent=5 // pred_check_branch
        %182 = sbr.rel (%p180) target = $region28
      $region27: #{tpu_custom_call.1} parent=5 // pred_region
        // Predicated region
        $region29: #{tpu_custom_call.1} parent=27 // pred_check
          %p183 = pneg %p34
        $region30: #{tpu_custom_call.1} parent=27 // pred_check_branch
          %185 = sbr.rel (%p183) target = $region32
        $region31: #{tpu_custom_call.1} parent=27 // pred_region
          %s186 = smul.u32 32, %s14
          %p187 = scmp.lt.s32.totalorder %s186, 63
          %s188 = scalar_select %p187, %s186, 63
          %s189 = smul.addr %s188, 4
          %s190 = scalar_lea.vmem %s0, %s189
          %s191 = smul.u32 32, %s14
        $region32: #{tpu_custom_call.1} parent=27 // pred_fallthru
          _
        // Predicated region
        $region33: #{tpu_custom_call.1} parent=27 // pred_check
          %p192 = pneg %p60
        $region34: #{tpu_custom_call.1} parent=27 // pred_check_branch
          %194 = sbr.rel (%p192) target = $region36
        $region35: #{tpu_custom_call.1} parent=27 // pred_region
          %s195 = smul.u32 32, %s14
          %p196 = scmp.lt.s32.totalorder %s195, 63
          %s197 = scalar_select %p196, %s195, 63
          %s198 = smul.addr %s197, 4
          %s199 = scalar_lea.vmem %s1, %s198
          %s200 = smul.u32 32, %s14
        $region36: #{tpu_custom_call.1} parent=27 // pred_fallthru
          _
      $region28: #{tpu_custom_call.1} parent=5 // pred_fallthru
        _
      %p201 = scmp.le.s32.totalorder 1, %s14
      %p202 = scmp.lt.s32.totalorder %s14, 3
      %p203 = pnand %p201, %p202
      %p204 = pneg %p203
      // Predicated region
      $region37: #{tpu_custom_call.1} parent=5 // pred_check
        _
      $region38: #{tpu_custom_call.1} parent=5 // pred_check_branch
        %206 = sbr.rel (%p203) target = $region40
      $region39: #{tpu_custom_call.1} parent=5 // pred_region
        %s207 = ssub.s32 %s14, 1
        %s208 = smul.u32 32, %s19
        %p209 = scmp.lt.s32.totalorder %s208, 63
        %s210 = scalar_select %p209, %s208, 63
        %s211 = smul.addr %s210, 4
        %s212 = scalar_lea.vmem %s0, %s211
        %p213 = pneg %p40
        %p214 = pneg %p37
        %s215 = smul.u32 32, %s19
        %p216 = scmp.lt.s32.totalorder %s215, 63
        %s217 = scalar_select %p216, %s215, 63
        %s218 = smul.addr %s217, 4
        %s219 = scalar_lea.vmem %s1, %s218
        %p220 = pneg %p66
        %p221 = pneg %p63
        %p222 = pneg %p87
        %p223 = pneg %p84
        %p224 = pneg %p108
        %p225 = pneg %p105
        %p226 = pneg %p129
        %p227 = pneg %p126
        %p228 = pneg %p155
        %p229 = pneg %p152
        %s230 = sand.u32 %s142, 1
        %s231 = scalar_lea.sflag [#allocation3], %s230
        %s232 = sand.u32 %s142, 1
        %s233 = smul.addr %s232, 128
        %s234 = scalar_lea.vmem [#allocation2], %s233
        %s235 = smul.u32 32, %s19
        %p236 = scmp.lt.s32.totalorder %s235, 63
        %s237 = scalar_select %p236, %s235, 63
        %s238 = smul.addr %s237, 4
        %s239 = scalar_lea.vmem %s0, %s238
        %s240 = smul.u32 32, %s19
        %s241 = smul.u32 32, %s19
        %p242 = scmp.lt.s32.totalorder %s241, 63
        %s243 = scalar_select %p242, %s241, 63
        %s244 = smul.addr %s243, 4
        %s245 = scalar_lea.vmem %s1, %s244
        %s246 = smul.u32 32, %s19
        %s247 = smul.u32 32, %s19
        %v249 = vld [vmem:[%s239] sm:$0xf]
        %v250 = vld [vmem:[%s239 + $0x4] sm:$0xf]
        %v251 = vld [vmem:[%s239 + $0x8] sm:$0xf]
        %v252 = vld [vmem:[%s239 + $0xc] sm:$0xf]
        %v253 = vld [vmem:[%s239 + $0x10] sm:$0xf]
        %v254 = vld [vmem:[%s239 + $0x14] sm:$0xf]
        %v255 = vld [vmem:[%s239 + $0x18] sm:$0xf]
        %v256 = vld [vmem:[%s239 + $0x1c] sm:$0xf]
        %v257 = vld [vmem:[%s239 + $0x20] sm:$0xf]
        %v258 = vld [vmem:[%s239 + $0x24] sm:$0xf]
        %v259 = vld [vmem:[%s239 + $0x28] sm:$0xf]
        %v260 = vld [vmem:[%s239 + $0x2c] sm:$0xf]
        %v261 = vld [vmem:[%s239 + $0x30] sm:$0xf]
        %v262 = vld [vmem:[%s239 + $0x34] sm:$0xf]
        %v263 = vld [vmem:[%s239 + $0x38] sm:$0xf]
        %v264 = vld [vmem:[%s239 + $0x3c] sm:$0xf]
        %v265 = vld [vmem:[%s239 + $0x40] sm:$0xf]
        %v266 = vld [vmem:[%s239 + $0x44] sm:$0xf]
        %v267 = vld [vmem:[%s239 + $0x48] sm:$0xf]
        %v268 = vld [vmem:[%s239 + $0x4c] sm:$0xf]
        %v269 = vld [vmem:[%s239 + $0x50] sm:$0xf]
        %v270 = vld [vmem:[%s239 + $0x54] sm:$0xf]
        %v271 = vld [vmem:[%s239 + $0x58] sm:$0xf]
        %v272 = vld [vmem:[%s239 + $0x5c] sm:$0xf]
        %v273 = vld [vmem:[%s239 + $0x60] sm:$0xf]
        %v274 = vld [vmem:[%s239 + $0x64] sm:$0xf]
        %v275 = vld [vmem:[%s239 + $0x68] sm:$0xf]
        %v276 = vld [vmem:[%s239 + $0x6c] sm:$0xf]
        %v277 = vld [vmem:[%s239 + $0x70] sm:$0xf]
        %v278 = vld [vmem:[%s239 + $0x74] sm:$0xf]
        %v279 = vld [vmem:[%s239 + $0x78] sm:$0xf]
        %v280 = vld [vmem:[%s239 + $0x7c] sm:$0xf]
        %v281 = vld [vmem:[%s2] sm:$0xf]
        %v282 = vld [vmem:[%s2 + $0x4] sm:$0xf]
        %v283 = vld [vmem:[%s2 + $0x8] sm:$0xf]
        %v284 = vld [vmem:[%s2 + $0xc] sm:$0xf]
        %v285 = vld [vmem:[%s2 + $0x10] sm:$0xf]
        %v286 = vld [vmem:[%s2 + $0x14] sm:$0xf]
        %v287 = vld [vmem:[%s2 + $0x18] sm:$0xf]
        %v288 = vld [vmem:[%s2 + $0x1c] sm:$0xf]
        %v289 = vld [vmem:[%s2 + $0x20] sm:$0xf]
        %v290 = vld [vmem:[%s2 + $0x24] sm:$0xf]
        %v291 = vld [vmem:[%s2 + $0x28] sm:$0xf]
        %v292 = vld [vmem:[%s2 + $0x2c] sm:$0xf]
        %v293 = vld [vmem:[%s2 + $0x30] sm:$0xf]
        %v294 = vld [vmem:[%s2 + $0x34] sm:$0xf]
        %v295 = vld [vmem:[%s2 + $0x38] sm:$0xf]
        %v296 = vld [vmem:[%s2 + $0x3c] sm:$0xf]
        %v297 = vld [vmem:[%s245] sm:$0xf]
        %v298 = vld [vmem:[%s245 + $0x4] sm:$0xf]
        %v299 = vld [vmem:[%s245 + $0x8] sm:$0xf]
        %v300 = vld [vmem:[%s245 + $0xc] sm:$0xf]
        %v301 = vld [vmem:[%s245 + $0x10] sm:$0xf]
        %v302 = vld [vmem:[%s245 + $0x14] sm:$0xf]
        %v303 = vld [vmem:[%s245 + $0x18] sm:$0xf]
        %v304 = vld [vmem:[%s245 + $0x1c] sm:$0xf]
        %v305 = vld [vmem:[%s245 + $0x20] sm:$0xf]
        %v306 = vld [vmem:[%s245 + $0x24] sm:$0xf]
        %v307 = vld [vmem:[%s245 + $0x28] sm:$0xf]
        %v308 = vld [vmem:[%s245 + $0x2c] sm:$0xf]
        %v309 = vld [vmem:[%s245 + $0x30] sm:$0xf]
        %v310 = vld [vmem:[%s245 + $0x34] sm:$0xf]
        %v311 = vld [vmem:[%s245 + $0x38] sm:$0xf]
        %v312 = vld [vmem:[%s245 + $0x3c] sm:$0xf]
        %v313 = vld [vmem:[%s245 + $0x40] sm:$0xf]
        %v314 = vld [vmem:[%s245 + $0x44] sm:$0xf]
        %v315 = vld [vmem:[%s245 + $0x48] sm:$0xf]
        %v316 = vld [vmem:[%s245 + $0x4c] sm:$0xf]
        %v317 = vld [vmem:[%s245 + $0x50] sm:$0xf]
        %v318 = vld [vmem:[%s245 + $0x54] sm:$0xf]
        %v319 = vld [vmem:[%s245 + $0x58] sm:$0xf]
        %v320 = vld [vmem:[%s245 + $0x5c] sm:$0xf]
        %v321 = vld [vmem:[%s245 + $0x60] sm:$0xf]
        %v322 = vld [vmem:[%s245 + $0x64] sm:$0xf]
        %v323 = vld [vmem:[%s245 + $0x68] sm:$0xf]
        %v324 = vld [vmem:[%s245 + $0x6c] sm:$0xf]
        %v325 = vld [vmem:[%s245 + $0x70] sm:$0xf]
        %v326 = vld [vmem:[%s245 + $0x74] sm:$0xf]
        %v327 = vld [vmem:[%s245 + $0x78] sm:$0xf]
        %v328 = vld [vmem:[%s245 + $0x7c] sm:$0xf]
        %v329 = vld [vmem:[%s3] sm:$0xf]
        %v330 = vld [vmem:[%s3 + $0x4] sm:$0xf]
        %v331 = vld [vmem:[%s3 + $0x8] sm:$0xf]
        %v332 = vld [vmem:[%s3 + $0xc] sm:$0xf]
        %v333 = vld [vmem:[%s3 + $0x10] sm:$0xf]
        %v334 = vld [vmem:[%s3 + $0x14] sm:$0xf]
        %v335 = vld [vmem:[%s3 + $0x18] sm:$0xf]
        %v336 = vld [vmem:[%s3 + $0x1c] sm:$0xf]
        %v369 = vunpack.c.l.b16 %v297
        %v370 = vunpack.c.l.b16 %v298
        %v371 = vunpack.c.l.b16 %v299
        %v372 = vunpack.c.l.b16 %v300
        %v373 = vunpack.c.l.b16 %v301
        %v374 = vunpack.c.l.b16 %v302
        %v375 = vunpack.c.l.b16 %v303
        %v376 = vunpack.c.l.b16 %v304
        %v377 = vunpack.c.l.b16 %v305
        %v378 = vunpack.c.l.b16 %v306
        %v379 = vunpack.c.l.b16 %v307
        %v380 = vunpack.c.l.b16 %v308
        %v381 = vunpack.c.l.b16 %v309
        %v382 = vunpack.c.l.b16 %v310
        %v383 = vunpack.c.l.b16 %v311
        %v384 = vunpack.c.l.b16 %v312
        %v385 = vunpack.c.l.b16 %v313
        %v386 = vunpack.c.l.b16 %v314
        %v387 = vunpack.c.l.b16 %v315
        %v388 = vunpack.c.l.b16 %v316
        %v389 = vunpack.c.l.b16 %v317
        %v390 = vunpack.c.l.b16 %v318
        %v391 = vunpack.c.l.b16 %v319
        %v392 = vunpack.c.l.b16 %v320
        %v393 = vunpack.c.l.b16 %v321
        %v394 = vunpack.c.l.b16 %v322
        %v395 = vunpack.c.l.b16 %v323
        %v396 = vunpack.c.l.b16 %v324
        %v397 = vunpack.c.l.b16 %v325
        %v398 = vunpack.c.l.b16 %v326
        %v399 = vunpack.c.l.b16 %v327
        %v400 = vunpack.c.l.b16 %v328
        %v401 = vpack.c.b16 %v370, %v369
        %v402 = vpack.c.b16 %v372, %v371
        %v403 = vpack.c.b16 %v374, %v373
        %v404 = vpack.c.b16 %v376, %v375
        %v405 = vpack.c.b16 %v378, %v377
        %v406 = vpack.c.b16 %v380, %v379
        %v407 = vpack.c.b16 %v382, %v381
        %v408 = vpack.c.b16 %v384, %v383
        %v409 = vpack.c.b16 %v386, %v385
        %v410 = vpack.c.b16 %v388, %v387
        %v411 = vpack.c.b16 %v390, %v389
        %v412 = vpack.c.b16 %v392, %v391
        %v413 = vpack.c.b16 %v394, %v393
        %v414 = vpack.c.b16 %v396, %v395
        %v415 = vpack.c.b16 %v398, %v397
        %v416 = vpack.c.b16 %v400, %v399
        %v425 = vunpack.c.l.b16 %v329
        %v426 = vunpack.c.l.b16 %v330
        %v427 = vunpack.c.l.b16 %v331
        %v428 = vunpack.c.l.b16 %v332
        %v429 = vunpack.c.l.b16 %v333
        %v430 = vunpack.c.l.b16 %v334
        %v431 = vunpack.c.l.b16 %v335
        %v432 = vunpack.c.l.b16 %v336
        %v433 = vpack.c.b16 %v426, %v425
        %v434 = vpack.c.b16 %v428, %v427
        %v435 = vpack.c.b16 %v430, %v429
        %v436 = vpack.c.b16 %v432, %v431
        %vm441 = vcmask 523264
        %v443 = vsel %vm441, %v401, 0
        %v446 = vsel %vm441, %v402, 0
        %v449 = vsel %vm441, %v403, 0
        %v452 = vsel %vm441, %v404, 0
        %v455 = vsel %vm441, %v405, 0
        %v458 = vsel %vm441, %v406, 0
        %v461 = vsel %vm441, %v407, 0
        %v464 = vsel %vm441, %v408, 0
        %v467 = vsel %vm441, %v409, 0
        %v470 = vsel %vm441, %v410, 0
        %v473 = vsel %vm441, %v411, 0
        %v476 = vsel %vm441, %v412, 0
        %v479 = vsel %vm441, %v413, 0
        %v482 = vsel %vm441, %v414, 0
        %v485 = vsel %vm441, %v415, 0
        %v488 = vsel %vm441, %v416, 0
        %490 = vmatprep.subr.bf16.mxu0 0
        %491 = vmatpush1.bf16.msra.mxu0 %v433
        %492 = vmatprep.subr.bf16.mxu0 0
        %493 = vmatpush1.bf16.msra.mxu0 %v434
        %494 = vmatprep.subr.bf16.mxu0 0
        %495 = vmatpush1.bf16.msra.mxu0 %v435
        %496 = vmatprep.subr.bf16.mxu0 0
        %497 = vmatpush1.bf16.msra.mxu0 %v436
        %498 = vmatprep.subr.bf16.mxu0 0
        %499 = vmatpush1.bf16.msra.mxu0 0
        %500 = vmatprep.subr.bf16.mxu0 0
        %501 = vmatpush1.bf16.msra.mxu0 0
        %502 = vmatprep.subr.bf16.mxu0 0
        %503 = vmatpush1.bf16.msra.mxu0 0
        %504 = vmatprep.subr.bf16.mxu0 0
        %505 = vmatpush1.bf16.msra.mxu0 0
        %506 = vmatprep.subr.bf16.mxu0 0
        %507 = vmatpush1.bf16.msra.mxu0 0
        %508 = vmatprep.subr.bf16.mxu0 0
        %509 = vmatpush1.bf16.msra.mxu0 0
        %510 = vmatprep.subr.bf16.mxu0 0
        %511 = vmatpush1.bf16.msra.mxu0 0
        %512 = vmatprep.subr.bf16.mxu0 0
        %513 = vmatpush1.bf16.msra.mxu0 0
        %514 = vmatprep.subr.bf16.mxu0 0
        %515 = vmatpush1.bf16.msra.mxu0 0
        %516 = vmatprep.subr.bf16.mxu0 0
        %517 = vmatpush1.bf16.msra.mxu0 0
        %518 = vmatprep.subr.bf16.mxu0 0
        %519 = vmatpush1.bf16.msra.mxu0 0
        %520 = vmatprep.subr.bf16.mxu0 0
        %521 = vmatpush1.bf16.msra.mxu0 0
        %522 = vmatprep.mubr.bf16.mxu0 0
        %523 = vmatmul.mubr.bf16.gmra.mrb[0].mxu0 %v443
        %v524 = vpop.f32.mrb[0].mxu0
        %v525 = vadd.f32 0.0, %v524
        %v526 = vpop.f32.mrb[0].mxu0
        %v527 = vpop.f32.mrb[0].mxu0
        %v528 = vadd.f32 0.0, %v527
        %v529 = vpop.f32.mrb[0].mxu0
        %530 = vmatprep.mubr.bf16.mxu0 0
        %531 = vmatmul.mubr.bf16.gmra.mrb[0].mxu0 %v446
        %v532 = vpop.f32.mrb[0].mxu0
        %v533 = vadd.f32 0.0, %v532
        %v534 = vpop.f32.mrb[0].mxu0
        %v535 = vpop.f32.mrb[0].mxu0
        %v536 = vadd.f32 0.0, %v535
        %v537 = vpop.f32.mrb[0].mxu0
        %538 = vmatprep.mubr.bf16.mxu0 0
        %539 = vmatmul.mubr.bf16.gmra.mrb[0].mxu0 %v449
        %v540 = vpop.f32.mrb[0].mxu0
        %v541 = vadd.f32 0.0, %v540
        %v542 = vpop.f32.mrb[0].mxu0
        %v543 = vpop.f32.mrb[0].mxu0
        %v544 = vadd.f32 0.0, %v543
        %v545 = vpop.f32.mrb[0].mxu0
        %546 = vmatprep.mubr.bf16.mxu0 0
        %547 = vmatmul.mubr.bf16.gmra.mrb[0].mxu0 %v452
        %v548 = vpop.f32.mrb[0].mxu0
        %v549 = vadd.f32 0.0, %v548
        %v550 = vpop.f32.mrb[0].mxu0
        %v551 = vpop.f32.mrb[0].mxu0
        %v552 = vadd.f32 0.0, %v551
        %v553 = vpop.f32.mrb[0].mxu0
        %554 = vmatprep.mubr.bf16.mxu0 0
        %555 = vmatmul.mubr.bf16.gmra.mrb[0].mxu0 %v455
        %v556 = vpop.f32.mrb[0].mxu0
        %v557 = vadd.f32 0.0, %v556
        %v558 = vpop.f32.mrb[0].mxu0
        %v559 = vpop.f32.mrb[0].mxu0
        %v560 = vadd.f32 0.0, %v559
        %v561 = vpop.f32.mrb[0].mxu0
        %562 = vmatprep.mubr.bf16.mxu0 0
        %563 = vmatmul.mubr.bf16.gmra.mrb[0].mxu0 %v458
        %v564 = vpop.f32.mrb[0].mxu0
        %v565 = vadd.f32 0.0, %v564
        %v566 = vpop.f32.mrb[0].mxu0
        %v567 = vpop.f32.mrb[0].mxu0
        %v568 = vadd.f32 0.0, %v567
        %v569 = vpop.f32.mrb[0].mxu0
        %570 = vmatprep.mubr.bf16.mxu0 0
        %571 = vmatmul.mubr.bf16.gmra.mrb[0].mxu0 %v461
        %v572 = vpop.f32.mrb[0].mxu0
        %v573 = vadd.f32 0.0, %v572
        %v574 = vpop.f32.mrb[0].mxu0
        %v575 = vpop.f32.mrb[0].mxu0
        %v576 = vadd.f32 0.0, %v575
        %v577 = vpop.f32.mrb[0].mxu0
        %578 = vmatprep.mubr.bf16.mxu0 0
        %579 = vmatmul.mubr.bf16.gmra.mrb[0].mxu0 %v464
        %v580 = vpop.f32.mrb[0].mxu0
        %v581 = vadd.f32 0.0, %v580
        %v582 = vpop.f32.mrb[0].mxu0
        %v583 = vpop.f32.mrb[0].mxu0
        %v584 = vadd.f32 0.0, %v583
        %v585 = vpop.f32.mrb[0].mxu0
        %586 = vmatprep.mubr.bf16.mxu0 0
        %587 = vmatmul.mubr.bf16.gmra.mrb[0].mxu0 %v467
        %v588 = vpop.f32.mrb[0].mxu0
        %v589 = vadd.f32 0.0, %v588
        %v590 = vpop.f32.mrb[0].mxu0
        %v591 = vpop.f32.mrb[0].mxu0
        %v592 = vadd.f32 0.0, %v591
        %v593 = vpop.f32.mrb[0].mxu0
        %594 = vmatprep.mubr.bf16.mxu0 0
        %595 = vmatmul.mubr.bf16.gmra.mrb[0].mxu0 %v470
        %v596 = vpop.f32.mrb[0].mxu0
        %v597 = vadd.f32 0.0, %v596
        %v598 = vpop.f32.mrb[0].mxu0
        %v599 = vpop.f32.mrb[0].mxu0
        %v600 = vadd.f32 0.0, %v599
        %v601 = vpop.f32.mrb[0].mxu0
        %602 = vmatprep.mubr.bf16.mxu0 0
        %603 = vmatmul.mubr.bf16.gmra.mrb[0].mxu0 %v473
        %v604 = vpop.f32.mrb[0].mxu0
        %v605 = vadd.f32 0.0, %v604
        %v606 = vpop.f32.mrb[0].mxu0
        %v607 = vpop.f32.mrb[0].mxu0
        %v608 = vadd.f32 0.0, %v607
        %v609 = vpop.f32.mrb[0].mxu0
        %610 = vmatprep.mubr.bf16.mxu0 0
        %611 = vmatmul.mubr.bf16.gmra.mrb[0].mxu0 %v476
        %v612 = vpop.f32.mrb[0].mxu0
        %v613 = vadd.f32 0.0, %v612
        %v614 = vpop.f32.mrb[0].mxu0
        %v615 = vpop.f32.mrb[0].mxu0
        %v616 = vadd.f32 0.0, %v615
        %v617 = vpop.f32.mrb[0].mxu0
        %618 = vmatprep.mubr.bf16.mxu0 0
        %619 = vmatmul.mubr.bf16.gmra.mrb[0].mxu0 %v479
        %v620 = vpop.f32.mrb[0].mxu0
        %v621 = vadd.f32 0.0, %v620
        %v622 = vpop.f32.mrb[0].mxu0
        %v623 = vpop.f32.mrb[0].mxu0
        %v624 = vadd.f32 0.0, %v623
        %v625 = vpop.f32.mrb[0].mxu0
        %626 = vmatprep.mubr.bf16.mxu0 0
        %627 = vmatmul.mubr.bf16.gmra.mrb[0].mxu0 %v482
        %v628 = vpop.f32.mrb[0].mxu0
        %v629 = vadd.f32 0.0, %v628
        %v630 = vpop.f32.mrb[0].mxu0
        %v631 = vpop.f32.mrb[0].mxu0
        %v632 = vadd.f32 0.0, %v631
        %v633 = vpop.f32.mrb[0].mxu0
        %634 = vmatprep.mubr.bf16.mxu0 0
        %635 = vmatmul.mubr.bf16.gmra.mrb[0].mxu0 %v485
        %v636 = vpop.f32.mrb[0].mxu0
        %v637 = vadd.f32 0.0, %v636
        %v638 = vpop.f32.mrb[0].mxu0
        %v639 = vpop.f32.mrb[0].mxu0
        %v640 = vadd.f32 0.0, %v639
        %v641 = vpop.f32.mrb[0].mxu0
        %642 = vmatprep.mubr.bf16.mxu0 0
        %643 = vmatmul.mubr.bf16.gmra.mrb[0].mxu0 %v488
        %v644 = vpop.f32.mrb[0].mxu0
        %v645 = vadd.f32 0.0, %v644
        %v646 = vpop.f32.mrb[0].mxu0
        %v647 = vpop.f32.mrb[0].mxu0
        %v648 = vadd.f32 0.0, %v647
        %v649 = vpop.f32.mrb[0].mxu0
        %650 = vdwg.mxu0
        %v683 = vunpack.c.l.b16 %v249
        %v684 = vunpack.c.l.b16 %v250
        %v685 = vunpack.c.l.b16 %v251
        %v686 = vunpack.c.l.b16 %v252
        %v687 = vunpack.c.l.b16 %v253
        %v688 = vunpack.c.l.b16 %v254
        %v689 = vunpack.c.l.b16 %v255
        %v690 = vunpack.c.l.b16 %v256
        %v691 = vunpack.c.l.b16 %v257
        %v692 = vunpack.c.l.b16 %v258
        %v693 = vunpack.c.l.b16 %v259
        %v694 = vunpack.c.l.b16 %v260
        %v695 = vunpack.c.l.b16 %v261
        %v696 = vunpack.c.l.b16 %v262
        %v697 = vunpack.c.l.b16 %v263
        %v698 = vunpack.c.l.b16 %v264
        %v699 = vunpack.c.l.b16 %v265
        %v700 = vunpack.c.l.b16 %v266
        %v701 = vunpack.c.l.b16 %v267
        %v702 = vunpack.c.l.b16 %v268
        %v703 = vunpack.c.l.b16 %v269
        %v704 = vunpack.c.l.b16 %v270
        %v705 = vunpack.c.l.b16 %v271
        %v706 = vunpack.c.l.b16 %v272
        %v707 = vunpack.c.l.b16 %v273
        %v708 = vunpack.c.l.b16 %v274
        %v709 = vunpack.c.l.b16 %v275
        %v710 = vunpack.c.l.b16 %v276
        %v711 = vunpack.c.l.b16 %v277
        %v712 = vunpack.c.l.b16 %v278
        %v713 = vunpack.c.l.b16 %v279
        %v714 = vunpack.c.l.b16 %v280
        %v715 = vpack.c.b16 %v684, %v683
        %v716 = vpack.c.b16 %v686, %v685
        %v717 = vpack.c.b16 %v688, %v687
        %v718 = vpack.c.b16 %v690, %v689
        %v719 = vpack.c.b16 %v692, %v691
        %v720 = vpack.c.b16 %v694, %v693
        %v721 = vpack.c.b16 %v696, %v695
        %v722 = vpack.c.b16 %v698, %v697
        %v723 = vpack.c.b16 %v700, %v699
        %v724 = vpack.c.b16 %v702, %v701
        %v725 = vpack.c.b16 %v704, %v703
        %v726 = vpack.c.b16 %v706, %v705
        %v727 = vpack.c.b16 %v708, %v707
        %v728 = vpack.c.b16 %v710, %v709
        %v729 = vpack.c.b16 %v712, %v711
        %v730 = vpack.c.b16 %v714, %v713
        %v763 = vunpack.c.l.b16 %v281
        %v764 = vunpack.c.l.b16 %v282
        %v765 = vunpack.c.l.b16 %v283
        %v766 = vunpack.c.l.b16 %v284
        %v767 = vunpack.c.l.b16 %v285
        %v768 = vunpack.c.l.b16 %v286
        %v769 = vunpack.c.l.b16 %v287
        %v770 = vunpack.c.l.b16 %v288
        %v771 = vunpack.c.l.b16 %v289
        %v772 = vunpack.c.l.b16 %v290
        %v773 = vunpack.c.l.b16 %v291
        %v774 = vunpack.c.l.b16 %v292
        %v775 = vunpack.c.l.b16 %v293
        %v776 = vunpack.c.l.b16 %v294
        %v777 = vunpack.c.l.b16 %v295
        %v778 = vunpack.c.l.b16 %v296
        %v779 = vpack.c.b16 %v764, %v763
        %v780 = vpack.c.b16 %v766, %v765
        %v781 = vpack.c.b16 %v768, %v767
        %v782 = vpack.c.b16 %v770, %v769
        %v783 = vpack.c.b16 %v772, %v771
        %v784 = vpack.c.b16 %v774, %v773
        %v785 = vpack.c.b16 %v776, %v775
        %v786 = vpack.c.b16 %v778, %v777
        %795 = vmatprep.subr.bf16.mxu0 0
        %796 = vmatpush1.bf16.msra.mxu0 %v779
        %797 = vmatprep.subr.bf16.mxu0 0
        %798 = vmatpush1.bf16.msra.mxu0 %v780
        %799 = vmatprep.subr.bf16.mxu0 0
        %800 = vmatpush1.bf16.msra.mxu0 %v781
        %801 = vmatprep.subr.bf16.mxu0 0
        %802 = vmatpush1.bf16.msra.mxu0 %v782
        %803 = vmatprep.subr.bf16.mxu0 0
        %804 = vmatpush1.bf16.msra.mxu0 %v783
        %805 = vmatprep.subr.bf16.mxu0 0
        %806 = vmatpush1.bf16.msra.mxu0 %v784
        %807 = vmatprep.subr.bf16.mxu0 0
        %808 = vmatpush1.bf16.msra.mxu0 %v785
        %809 = vmatprep.subr.bf16.mxu0 0
        %810 = vmatpush1.bf16.msra.mxu0 %v786
        %811 = vmatprep.subr.bf16.mxu0 0
        %812 = vmatpush1.bf16.msra.mxu0 0
        %813 = vmatprep.subr.bf16.mxu0 0
        %814 = vmatpush1.bf16.msra.mxu0 0
        %815 = vmatprep.subr.bf16.mxu0 0
        %816 = vmatpush1.bf16.msra.mxu0 0
        %817 = vmatprep.subr.bf16.mxu0 0
        %818 = vmatpush1.bf16.msra.mxu0 0
        %819 = vmatprep.subr.bf16.mxu0 0
        %820 = vmatpush1.bf16.msra.mxu0 0
        %821 = vmatprep.subr.bf16.mxu0 0
        %822 = vmatpush1.bf16.msra.mxu0 0
        %823 = vmatprep.subr.bf16.mxu0 0
        %824 = vmatpush1.bf16.msra.mxu0 0
        %825 = vmatprep.subr.bf16.mxu0 0
        %826 = vmatpush1.bf16.msra.mxu0 0
        %827 = vmatprep.mubr.bf16.mxu0 0
        %828 = vmatmul.mubr.bf16.gmra.mrb[0].mxu0 %v715
        %v829 = vpop.f32.mrb[0].mxu0
        %v830 = vadd.f32 %v525, %v829
        %v831 = vpop.f32.mrb[0].mxu0
        %v832 = vpop.f32.mrb[0].mxu0
        %v833 = vadd.f32 %v528, %v832
        %v834 = vpop.f32.mrb[0].mxu0
        %835 = vmatprep.mubr.bf16.mxu0 0
        %836 = vmatmul.mubr.bf16.gmra.mrb[0].mxu0 %v716
        %v837 = vpop.f32.mrb[0].mxu0
        %v838 = vadd.f32 %v533, %v837
        %v839 = vpop.f32.mrb[0].mxu0
        %v840 = vpop.f32.mrb[0].mxu0
        %v841 = vadd.f32 %v536, %v840
        %v842 = vpop.f32.mrb[0].mxu0
        %843 = vmatprep.mubr.bf16.mxu0 0
        %844 = vmatmul.mubr.bf16.gmra.mrb[0].mxu0 %v717
        %v845 = vpop.f32.mrb[0].mxu0
        %v846 = vadd.f32 %v541, %v845
        %v847 = vpop.f32.mrb[0].mxu0
        %v848 = vpop.f32.mrb[0].mxu0
        %v849 = vadd.f32 %v544, %v848
        %v850 = vpop.f32.mrb[0].mxu0
        %851 = vmatprep.mubr.bf16.mxu0 0
        %852 = vmatmul.mubr.bf16.gmra.mrb[0].mxu0 %v718
        %v853 = vpop.f32.mrb[0].mxu0
        %v854 = vadd.f32 %v549, %v853
        %v855 = vpop.f32.mrb[0].mxu0
        %v856 = vpop.f32.mrb[0].mxu0
        %v857 = vadd.f32 %v552, %v856
        %v858 = vpop.f32.mrb[0].mxu0
        %859 = vmatprep.mubr.bf16.mxu0 0
        %860 = vmatmul.mubr.bf16.gmra.mrb[0].mxu0 %v719
        %v861 = vpop.f32.mrb[0].mxu0
        %v862 = vadd.f32 %v557, %v861
        %v863 = vpop.f32.mrb[0].mxu0
        %v864 = vpop.f32.mrb[0].mxu0
        %v865 = vadd.f32 %v560, %v864
        %v866 = vpop.f32.mrb[0].mxu0
        %867 = vmatprep.mubr.bf16.mxu0 0
        %868 = vmatmul.mubr.bf16.gmra.mrb[0].mxu0 %v720
        %v869 = vpop.f32.mrb[0].mxu0
        %v870 = vadd.f32 %v565, %v869
        %v871 = vpop.f32.mrb[0].mxu0
        %v872 = vpop.f32.mrb[0].mxu0
        %v873 = vadd.f32 %v568, %v872
        %v874 = vpop.f32.mrb[0].mxu0
        %875 = vmatprep.mubr.bf16.mxu0 0
        %876 = vmatmul.mubr.bf16.gmra.mrb[0].mxu0 %v721
        %v877 = vpop.f32.mrb[0].mxu0
        %v878 = vadd.f32 %v573, %v877
        %v879 = vpop.f32.mrb[0].mxu0
        %v880 = vpop.f32.mrb[0].mxu0
        %v881 = vadd.f32 %v576, %v880
        %v882 = vpop.f32.mrb[0].mxu0
        %883 = vmatprep.mubr.bf16.mxu0 0
        %884 = vmatmul.mubr.bf16.gmra.mrb[0].mxu0 %v722
        %v885 = vpop.f32.mrb[0].mxu0
        %v886 = vadd.f32 %v581, %v885
        %v887 = vpop.f32.mrb[0].mxu0
        %v888 = vpop.f32.mrb[0].mxu0
        %v889 = vadd.f32 %v584, %v888
        %v890 = vpop.f32.mrb[0].mxu0
        %891 = vmatprep.mubr.bf16.mxu0 0
        %892 = vmatmul.mubr.bf16.gmra.mrb[0].mxu0 %v723
        %v893 = vpop.f32.mrb[0].mxu0
        %v894 = vadd.f32 %v589, %v893
        %v895 = vpop.f32.mrb[0].mxu0
        %v896 = vpop.f32.mrb[0].mxu0
        %v897 = vadd.f32 %v592, %v896
        %v898 = vpop.f32.mrb[0].mxu0
        %899 = vmatprep.mubr.bf16.mxu0 0
        %900 = vmatmul.mubr.bf16.gmra.mrb[0].mxu0 %v724
        %v901 = vpop.f32.mrb[0].mxu0
        %v902 = vadd.f32 %v597, %v901
        %v903 = vpop.f32.mrb[0].mxu0
        %v904 = vpop.f32.mrb[0].mxu0
        %v905 = vadd.f32 %v600, %v904
        %v906 = vpop.f32.mrb[0].mxu0
        %907 = vmatprep.mubr.bf16.mxu0 0
        %908 = vmatmul.mubr.bf16.gmra.mrb[0].mxu0 %v725
        %v909 = vpop.f32.mrb[0].mxu0
        %v910 = vadd.f32 %v605, %v909
        %v911 = vpop.f32.mrb[0].mxu0
        %v912 = vpop.f32.mrb[0].mxu0
        %v913 = vadd.f32 %v608, %v912
        %v914 = vpop.f32.mrb[0].mxu0
        %915 = vmatprep.mubr.bf16.mxu0 0
        %916 = vmatmul.mubr.bf16.gmra.mrb[0].mxu0 %v726
        %v917 = vpop.f32.mrb[0].mxu0
        %v918 = vadd.f32 %v613, %v917
        %v919 = vpop.f32.mrb[0].mxu0
        %v920 = vpop.f32.mrb[0].mxu0
        %v921 = vadd.f32 %v616, %v920
        %v922 = vpop.f32.mrb[0].mxu0
        %923 = vmatprep.mubr.bf16.mxu0 0
        %924 = vmatmul.mubr.bf16.gmra.mrb[0].mxu0 %v727
        %v925 = vpop.f32.mrb[0].mxu0
        %v926 = vadd.f32 %v621, %v925
        %v927 = vpop.f32.mrb[0].mxu0
        %v928 = vpop.f32.mrb[0].mxu0
        %v929 = vadd.f32 %v624, %v928
        %v930 = vpop.f32.mrb[0].mxu0
        %931 = vmatprep.mubr.bf16.mxu0 0
        %932 = vmatmul.mubr.bf16.gmra.mrb[0].mxu0 %v728
        %v933 = vpop.f32.mrb[0].mxu0
        %v934 = vadd.f32 %v629, %v933
        %v935 = vpop.f32.mrb[0].mxu0
        %v936 = vpop.f32.mrb[0].mxu0
        %v937 = vadd.f32 %v632, %v936
        %v938 = vpop.f32.mrb[0].mxu0
        %939 = vmatprep.mubr.bf16.mxu0 0
        %940 = vmatmul.mubr.bf16.gmra.mrb[0].mxu0 %v729
        %v941 = vpop.f32.mrb[0].mxu0
        %v942 = vadd.f32 %v637, %v941
        %v943 = vpop.f32.mrb[0].mxu0
        %v944 = vpop.f32.mrb[0].mxu0
        %v945 = vadd.f32 %v640, %v944
        %v946 = vpop.f32.mrb[0].mxu0
        %947 = vmatprep.mubr.bf16.mxu0 0
        %948 = vmatmul.mubr.bf16.gmra.mrb[0].mxu0 %v730
        %v949 = vpop.f32.mrb[0].mxu0
        %v950 = vadd.f32 %v645, %v949
        %v951 = vpop.f32.mrb[0].mxu0
        %v952 = vpop.f32.mrb[0].mxu0
        %v953 = vadd.f32 %v648, %v952
        %v954 = vpop.f32.mrb[0].mxu0
        %955 = vdwg.mxu0
        %v956 = vld [vmem:[%s4] sm:$0x1]
        %v958 = vlaneseq
        %v959 = vshrl.u32 %v958, 7
        %v960 = vsub.s32 0, %v959
        %v961 = vrot.slane %v956, %v960
        %v963 = vadd.f32 %v830, %v961
        %v964 = vadd.f32 %v833, %v961
        %v965 = vadd.f32 %v838, %v961
        %v966 = vadd.f32 %v841, %v961
        %v967 = vadd.f32 %v846, %v961
        %v968 = vadd.f32 %v849, %v961
        %v969 = vadd.f32 %v854, %v961
        %v970 = vadd.f32 %v857, %v961
        %v971 = vadd.f32 %v862, %v961
        %v972 = vadd.f32 %v865, %v961
        %v973 = vadd.f32 %v870, %v961
        %v974 = vadd.f32 %v873, %v961
        %v975 = vadd.f32 %v878, %v961
        %v976 = vadd.f32 %v881, %v961
        %v977 = vadd.f32 %v886, %v961
        %v978 = vadd.f32 %v889, %v961
        %v979 = vadd.f32 %v894, %v961
        %v980 = vadd.f32 %v897, %v961
        %v981 = vadd.f32 %v902, %v961
        %v982 = vadd.f32 %v905, %v961
        %v983 = vadd.f32 %v910, %v961
        %v984 = vadd.f32 %v913, %v961
        %v985 = vadd.f32 %v918, %v961
        %v986 = vadd.f32 %v921, %v961
        %v987 = vadd.f32 %v926, %v961
        %v988 = vadd.f32 %v929, %v961
        %v989 = vadd.f32 %v934, %v961
        %v990 = vadd.f32 %v937, %v961
        %v991 = vadd.f32 %v942, %v961
        %v992 = vadd.f32 %v945, %v961
        %v993 = vadd.f32 %v950, %v961
        %v994 = vadd.f32 %v953, %v961
        %v995 = vunpack.c.l.bf16 %v249
        %v996 = vunpack.c.l.bf16 %v250
        %v997 = vunpack.c.l.bf16 %v251
        %v998 = vunpack.c.l.bf16 %v252
        %v999 = vunpack.c.l.bf16 %v253
        %v1000 = vunpack.c.l.bf16 %v254
        %v1001 = vunpack.c.l.bf16 %v255
        %v1002 = vunpack.c.l.bf16 %v256
        %v1003 = vunpack.c.l.bf16 %v257
        %v1004 = vunpack.c.l.bf16 %v258
        %v1005 = vunpack.c.l.bf16 %v259
        %v1006 = vunpack.c.l.bf16 %v260
        %v1007 = vunpack.c.l.bf16 %v261
        %v1008 = vunpack.c.l.bf16 %v262
        %v1009 = vunpack.c.l.bf16 %v263
        %v1010 = vunpack.c.l.bf16 %v264
        %v1011 = vunpack.c.l.bf16 %v265
        %v1012 = vunpack.c.l.bf16 %v266
        %v1013 = vunpack.c.l.bf16 %v267
        %v1014 = vunpack.c.l.bf16 %v268
        %v1015 = vunpack.c.l.bf16 %v269
        %v1016 = vunpack.c.l.bf16 %v270
        %v1017 = vunpack.c.l.bf16 %v271
        %v1018 = vunpack.c.l.bf16 %v272
        %v1019 = vunpack.c.l.bf16 %v273
        %v1020 = vunpack.c.l.bf16 %v274
        %v1021 = vunpack.c.l.bf16 %v275
        %v1022 = vunpack.c.l.bf16 %v276
        %v1023 = vunpack.c.l.bf16 %v277
        %v1024 = vunpack.c.l.bf16 %v278
        %v1025 = vunpack.c.l.bf16 %v279
        %v1026 = vunpack.c.l.bf16 %v280
        %v1027 = vadd.f32 %v963, %v995
        %v1028 = vadd.f32 %v964, %v996
        %v1029 = vadd.f32 %v965, %v997
        %v1030 = vadd.f32 %v966, %v998
        %v1031 = vadd.f32 %v967, %v999
        %v1032 = vadd.f32 %v968, %v1000
        %v1033 = vadd.f32 %v969, %v1001
        %v1034 = vadd.f32 %v970, %v1002
        %v1035 = vadd.f32 %v971, %v1003
        %v1036 = vadd.f32 %v972, %v1004
        %v1037 = vadd.f32 %v973, %v1005
        %v1038 = vadd.f32 %v974, %v1006
        %v1039 = vadd.f32 %v975, %v1007
        %v1040 = vadd.f32 %v976, %v1008
        %v1041 = vadd.f32 %v977, %v1009
        %v1042 = vadd.f32 %v978, %v1010
        %v1043 = vadd.f32 %v979, %v1011
        %v1044 = vadd.f32 %v980, %v1012
        %v1045 = vadd.f32 %v981, %v1013
        %v1046 = vadd.f32 %v982, %v1014
        %v1047 = vadd.f32 %v983, %v1015
        %v1048 = vadd.f32 %v984, %v1016
        %v1049 = vadd.f32 %v985, %v1017
        %v1050 = vadd.f32 %v986, %v1018
        %v1051 = vadd.f32 %v987, %v1019
        %v1052 = vadd.f32 %v988, %v1020
        %v1053 = vadd.f32 %v989, %v1021
        %v1054 = vadd.f32 %v990, %v1022
        %v1055 = vadd.f32 %v991, %v1023
        %v1056 = vadd.f32 %v992, %v1024
        %v1057 = vadd.f32 %v993, %v1025
        %v1058 = vadd.f32 %v994, %v1026
        %v1059 = vmax.f32 %v1027, 0.0
        %v1060 = vmax.f32 %v1028, 0.0
        %v1061 = vmax.f32 %v1029, 0.0
        %v1062 = vmax.f32 %v1030, 0.0
        %v1063 = vmax.f32 %v1031, 0.0
        %v1064 = vmax.f32 %v1032, 0.0
        %v1065 = vmax.f32 %v1033, 0.0
        %v1066 = vmax.f32 %v1034, 0.0
        %v1067 = vmax.f32 %v1035, 0.0
        %v1068 = vmax.f32 %v1036, 0.0
        %v1069 = vmax.f32 %v1037, 0.0
        %v1070 = vmax.f32 %v1038, 0.0
        %v1071 = vmax.f32 %v1039, 0.0
        %v1072 = vmax.f32 %v1040, 0.0
        %v1073 = vmax.f32 %v1041, 0.0
        %v1074 = vmax.f32 %v1042, 0.0
        %v1075 = vmax.f32 %v1043, 0.0
        %v1076 = vmax.f32 %v1044, 0.0
        %v1077 = vmax.f32 %v1045, 0.0
        %v1078 = vmax.f32 %v1046, 0.0
        %v1079 = vmax.f32 %v1047, 0.0
        %v1080 = vmax.f32 %v1048, 0.0
        %v1081 = vmax.f32 %v1049, 0.0
        %v1082 = vmax.f32 %v1050, 0.0
        %v1083 = vmax.f32 %v1051, 0.0
        %v1084 = vmax.f32 %v1052, 0.0
        %v1085 = vmax.f32 %v1053, 0.0
        %v1086 = vmax.f32 %v1054, 0.0
        %v1087 = vmax.f32 %v1055, 0.0
        %v1088 = vmax.f32 %v1056, 0.0
        %v1089 = vmax.f32 %v1057, 0.0
        %v1090 = vmax.f32 %v1058, 0.0
        %v1091 = vpack.c.bf16 %v1060, %v1059
        %v1092 = vpack.c.bf16 %v1062, %v1061
        %v1093 = vpack.c.bf16 %v1064, %v1063
        %v1094 = vpack.c.bf16 %v1066, %v1065
        %v1095 = vpack.c.bf16 %v1068, %v1067
        %v1096 = vpack.c.bf16 %v1070, %v1069
        %v1097 = vpack.c.bf16 %v1072, %v1071
        %v1098 = vpack.c.bf16 %v1074, %v1073
        %v1099 = vpack.c.bf16 %v1076, %v1075
        %v1100 = vpack.c.bf16 %v1078, %v1077
        %v1101 = vpack.c.bf16 %v1080, %v1079
        %v1102 = vpack.c.bf16 %v1082, %v1081
        %v1103 = vpack.c.bf16 %v1084, %v1083
        %v1104 = vpack.c.bf16 %v1086, %v1085
        %v1105 = vpack.c.bf16 %v1088, %v1087
        %v1106 = vpack.c.bf16 %v1090, %v1089
        %v1123 = vunpack.c.l.b16 %v1091
        %v1124 = vunpack.c.h.b16 %v1091
        %v1125 = vunpack.c.l.b16 %v1092
        %v1126 = vunpack.c.h.b16 %v1092
        %v1127 = vunpack.c.l.b16 %v1093
        %v1128 = vunpack.c.h.b16 %v1093
        %v1129 = vunpack.c.l.b16 %v1094
        %v1130 = vunpack.c.h.b16 %v1094
        %v1131 = vunpack.c.l.b16 %v1095
        %v1132 = vunpack.c.h.b16 %v1095
        %v1133 = vunpack.c.l.b16 %v1096
        %v1134 = vunpack.c.h.b16 %v1096
        %v1135 = vunpack.c.l.b16 %v1097
        %v1136 = vunpack.c.h.b16 %v1097
        %v1137 = vunpack.c.l.b16 %v1098
        %v1138 = vunpack.c.h.b16 %v1098
        %v1139 = vunpack.c.l.b16 %v1099
        %v1140 = vunpack.c.h.b16 %v1099
        %v1141 = vunpack.c.l.b16 %v1100
        %v1142 = vunpack.c.h.b16 %v1100
        %v1143 = vunpack.c.l.b16 %v1101
        %v1144 = vunpack.c.h.b16 %v1101
        %v1145 = vunpack.c.l.b16 %v1102
        %v1146 = vunpack.c.h.b16 %v1102
        %v1147 = vunpack.c.l.b16 %v1103
        %v1148 = vunpack.c.h.b16 %v1103
        %v1149 = vunpack.c.l.b16 %v1104
        %v1150 = vunpack.c.h.b16 %v1104
        %v1151 = vunpack.c.l.b16 %v1105
        %v1152 = vunpack.c.h.b16 %v1105
        %v1153 = vunpack.c.l.b16 %v1106
        %v1154 = vunpack.c.h.b16 %v1106
        %v1155 = vpack.c.b16 %v1123, %v1123
        %v1156 = vpack.c.b16 %v1124, %v1124
        %v1157 = vpack.c.b16 %v1125, %v1125
        %v1158 = vpack.c.b16 %v1126, %v1126
        %v1159 = vpack.c.b16 %v1127, %v1127
        %v1160 = vpack.c.b16 %v1128, %v1128
        %v1161 = vpack.c.b16 %v1129, %v1129
        %v1162 = vpack.c.b16 %v1130, %v1130
        %v1163 = vpack.c.b16 %v1131, %v1131
        %v1164 = vpack.c.b16 %v1132, %v1132
        %v1165 = vpack.c.b16 %v1133, %v1133
        %v1166 = vpack.c.b16 %v1134, %v1134
        %v1167 = vpack.c.b16 %v1135, %v1135
        %v1168 = vpack.c.b16 %v1136, %v1136
        %v1169 = vpack.c.b16 %v1137, %v1137
        %v1170 = vpack.c.b16 %v1138, %v1138
        %v1171 = vpack.c.b16 %v1139, %v1139
        %v1172 = vpack.c.b16 %v1140, %v1140
        %v1173 = vpack.c.b16 %v1141, %v1141
        %v1174 = vpack.c.b16 %v1142, %v1142
        %v1175 = vpack.c.b16 %v1143, %v1143
        %v1176 = vpack.c.b16 %v1144, %v1144
        %v1177 = vpack.c.b16 %v1145, %v1145
        %v1178 = vpack.c.b16 %v1146, %v1146
        %v1179 = vpack.c.b16 %v1147, %v1147
        %v1180 = vpack.c.b16 %v1148, %v1148
        %v1181 = vpack.c.b16 %v1149, %v1149
        %v1182 = vpack.c.b16 %v1150, %v1150
        %v1183 = vpack.c.b16 %v1151, %v1151
        %v1184 = vpack.c.b16 %v1152, %v1152
        %v1185 = vpack.c.b16 %v1153, %v1153
        %v1186 = vpack.c.b16 %v1154, %v1154
        %1219 = vst [vmem:[%s234] sm:$0xf] %v1155
        %1220 = vst [vmem:[%s234 + $0x4] sm:$0xf] %v1156
        %1221 = vst [vmem:[%s234 + $0x8] sm:$0xf] %v1157
        %1222 = vst [vmem:[%s234 + $0xc] sm:$0xf] %v1158
        %1223 = vst [vmem:[%s234 + $0x10] sm:$0xf] %v1159
        %1224 = vst [vmem:[%s234 + $0x14] sm:$0xf] %v1160
        %1225 = vst [vmem:[%s234 + $0x18] sm:$0xf] %v1161
        %1226 = vst [vmem:[%s234 + $0x1c] sm:$0xf] %v1162
        %1227 = vst [vmem:[%s234 + $0x20] sm:$0xf] %v1163
        %1228 = vst [vmem:[%s234 + $0x24] sm:$0xf] %v1164
        %1229 = vst [vmem:[%s234 + $0x28] sm:$0xf] %v1165
        %1230 = vst [vmem:[%s234 + $0x2c] sm:$0xf] %v1166
        %1231 = vst [vmem:[%s234 + $0x30] sm:$0xf] %v1167
        %1232 = vst [vmem:[%s234 + $0x34] sm:$0xf] %v1168
        %1233 = vst [vmem:[%s234 + $0x38] sm:$0xf] %v1169
        %1234 = vst [vmem:[%s234 + $0x3c] sm:$0xf] %v1170
        %1235 = vst [vmem:[%s234 + $0x40] sm:$0xf] %v1171
        %1236 = vst [vmem:[%s234 + $0x44] sm:$0xf] %v1172
        %1237 = vst [vmem:[%s234 + $0x48] sm:$0xf] %v1173
        %1238 = vst [vmem:[%s234 + $0x4c] sm:$0xf] %v1174
        %1239 = vst [vmem:[%s234 + $0x50] sm:$0xf] %v1175
        %1240 = vst [vmem:[%s234 + $0x54] sm:$0xf] %v1176
        %1241 = vst [vmem:[%s234 + $0x58] sm:$0xf] %v1177
        %1242 = vst [vmem:[%s234 + $0x5c] sm:$0xf] %v1178
        %1243 = vst [vmem:[%s234 + $0x60] sm:$0xf] %v1179
        %1244 = vst [vmem:[%s234 + $0x64] sm:$0xf] %v1180
        %1245 = vst [vmem:[%s234 + $0x68] sm:$0xf] %v1181
        %1246 = vst [vmem:[%s234 + $0x6c] sm:$0xf] %v1182
        %1247 = vst [vmem:[%s234 + $0x70] sm:$0xf] %v1183
        %1248 = vst [vmem:[%s234 + $0x74] sm:$0xf] %v1184
        %1249 = vst [vmem:[%s234 + $0x78] sm:$0xf] %v1185
        %1250 = vst [vmem:[%s234 + $0x7c] sm:$0xf] %v1186
        %s1251 = sand.u32 %s142, 1
        %s1252 = scalar_lea.sflag [#allocation3], %s1251
        %s1253 = sand.u32 %s142, 1
        %s1254 = smul.addr %s1253, 128
        %s1255 = scalar_lea.vmem [#allocation2], %s1254
        // Predicated region
        $region41: #{tpu_custom_call.1} parent=39 // pred_check
          %p1256 = pneg %p152
        $region42: #{tpu_custom_call.1} parent=39 // pred_check_branch
          %1258 = sbr.rel (%p1256) target = $region44
        $region43: #{tpu_custom_call.1} parent=39 // pred_region
          %s1259 = smul.u32 32, %s19
          %s1261 = ssub.s32 2048, 2048
          %1262 = vsyncadd %s1252, %s1261
          %s1263 = smul.addr %s1259, 64
          %s1264 = scalar_lea.hbm %s5, %s1263
          %s1265 = sshll.u32 %s1255, 4
          %s1266 = int_to_ptr.vmem [resolvable:$true] %s1265
          %1271 = dma.vmem_to_hbm [thread:$0]  %s1266, 2048, %s1264, %s1252, 64, 64, 4
        $region44: #{tpu_custom_call.1} parent=39 // pred_fallthru
          _
      $region40: #{tpu_custom_call.1} parent=5 // pred_fallthru
        _
      %p1272 = scmp.le.s32.totalorder 2, %s14
      // Predicated region
      $region45: #{tpu_custom_call.1} parent=5 // pred_check
        %p1273 = pneg %p1272
      $region46: #{tpu_custom_call.1} parent=5 // pred_check_branch
        %1275 = sbr.rel (%p1273) target = $region48
      $region47: #{tpu_custom_call.1} parent=5 // pred_region
        %s1276 = ssub.s32 %s14, 2
        // Predicated region
        $region49: #{tpu_custom_call.1} parent=47 // pred_check
          %p1277 = pneg %p158
        $region50: #{tpu_custom_call.1} parent=47 // pred_check_branch
          %1279 = sbr.rel (%p1277) target = $region52
        $region51: #{tpu_custom_call.1} parent=47 // pred_region
          %s1280 = sand.u32 %s143, 1
          %s1281 = scalar_lea.sflag [#allocation3], %s1280
          %s1282 = sand.u32 %s143, 1
          %s1283 = smul.addr %s1282, 128
          %s1284 = scalar_lea.vmem [#allocation2], %s1283
          %1285 = dma.done %s1281, 2048
        $region52: #{tpu_custom_call.1} parent=47 // pred_fallthru
          _
      $region48: #{tpu_custom_call.1} parent=5 // pred_fallthru
        _
    $region6: #{tpu_custom_call.1} parent=1 // loop_footer
      %s18 = sadd.s32 1, %s14
    $region7: #{tpu_custom_call.1} parent=1 // loop_footer_branch
      %13 = sbr.rel target = $region3
    $region8: #{tpu_custom_call.1} parent=1 // loop_exit
      _
    %1286 = vsyncpa [#allocation3], 1
    %s1287 = scalar_lea.sflag [#allocation3], 1
    %1288 = vsyncpa %s1287, 1

</llo_original>
